<compile_context>
chip_gen: v6e
topology: v6e:2x2x1
jax: 0.10.0
libtpu: 0.0.40
codegen_flags: <defaults>
</compile_context>

<pallas_src>
import functools

import jax
import jax.numpy as jnp
from jax.experimental import pallas as pl
from jax.experimental.pallas import tpu as pltpu


def _ceil(n: int, m: int) -> int:
    return ((n + m - 1) // m) * m


# ----------------------------------------------------------------------------
# Parameter packing.
#   w_packed : bf16, all matmul weight matrices, 16-row aligned slabs,
#              sliced at true widths in the kernel.
#   v_packed : f32, per-layer vectors [label-row, bias, gamma, beta], the
#              output row w_out and b_out, 8-row aligned slabs.
# ----------------------------------------------------------------------------
def _build_layout(feat_dim, hidden_dim):
    hidden_dim = tuple(hidden_dim)
    n = len(hidden_dim)
    max_w = max(hidden_dim)

    w_layout, w_rows = {}, 0

    def addw(name, rows):
        nonlocal w_rows
        w_layout[name] = w_rows
        w_rows += _ceil(rows, 16)          # bf16 sublane tile = 16 rows

    addw("w0", feat_dim)                   # (feat_dim, hidden[0])
    for i in range(1, n):
        addw(f"w{i}", hidden_dim[i - 1])   # (hidden[i-1], hidden[i])

    v_layout, v_rows = {}, 0

    def addv(name, rows):
        nonlocal v_rows
        v_layout[name] = v_rows
        v_rows += _ceil(rows, 8)           # f32 sublane tile = 8 rows

    addv("v0", 4)                          # [W0 label row, b0, gamma0, beta0]
    for i in range(1, n):
        addv(f"v{i}", 3)                   # [b_i, gamma_i, beta_i]
    addv("out", 2)                         # [w_out row, b_out at col 0]

    return w_layout, w_rows, v_layout, v_rows, max_w


def pack_params(params, feat_dim, hidden_dim):
    hidden_dim = tuple(hidden_dim)
    w_layout, w_rows, v_layout, v_rows, max_w = _build_layout(feat_dim, hidden_dim)
    n = len(hidden_dim)

    w_packed = jnp.zeros((w_rows, max_w), jnp.bfloat16)
    v_packed = jnp.zeros((v_rows, max_w), jnp.float32)

    # Layer 0: split the label row out of W0.
    w0, b0, g0, be0 = params["hidden"][0]          # w0: (feat_dim+1, hidden0)
    r = w_layout["w0"]
    w_packed = w_packed.at[r:r + feat_dim, :hidden_dim[0]].set(
        w0[:feat_dim, :].astype(jnp.bfloat16))
    v0 = jnp.concatenate(
        [w0[feat_dim:feat_dim + 1, :], b0, g0, be0], axis=0).astype(jnp.float32)
    r = v_layout["v0"]
    v_packed = v_packed.at[r:r + 4, :hidden_dim[0]].set(v0)

    # Hidden layers 1..n-1.
    for i in range(1, n):
        wi, bi, gi, bei = params["hidden"][i]
        r = w_layout[f"w{i}"]
        w_packed = w_packed.at[r:r + hidden_dim[i - 1], :hidden_dim[i]].set(
            wi.astype(jnp.bfloat16))
        vi = jnp.concatenate([bi, gi, bei], axis=0).astype(jnp.float32)
        r = v_layout[f"v{i}"]
        v_packed = v_packed.at[r:r + 3, :hidden_dim[i]].set(vi)

    # Output layer.
    w_out, b_out = params["out"]                   # (hidden[-1], 1), (1, 1)
    r = v_layout["out"]
    v_packed = v_packed.at[r, :hidden_dim[-1]].set(
        w_out[:, 0].astype(jnp.float32))
    v_packed = v_packed.at[r + 1, 0].set(b_out[0, 0].astype(jnp.float32))
    return w_packed, v_packed


# ----------------------------------------------------------------------------
# Kernel
# ----------------------------------------------------------------------------
def _make_kernel(feat_dim, hidden_dim, w_layout, v_layout, apply_bn, eps=1e-5):
    hidden_dim = tuple(hidden_dim)
    n = len(hidden_dim)

    def batch_norm(act, gamma, beta):
        # Training-mode BN: biased batch stats, two-pass variance, fused affine.
        mean = jnp.mean(act, axis=0, keepdims=True)
        d = act - mean
        var = jnp.mean(d * d, axis=0, keepdims=True)
        scale = gamma * jax.lax.rsqrt(var + eps)    # rsqrt -> EUP (free slot)
        return d * scale + beta

    def kernel(h_ref, label_ref, w_ref, v_ref, out_ref):
        label = label_ref[...]                      # (B, 1) f32

        # TODO(synk): dropout is an eval-mode identity here.

        # ---- layer 0: Linear([h, label]) + ReLU, concat folded into the dot.
        r = w_layout["w0"]
        w0 = w_ref[r:r + feat_dim, :hidden_dim[0]]          # bf16 (feat, h0)
        r = v_layout["v0"]
        v0 = v_ref[r:r + 4, :hidden_dim[0]]                 # f32  (4, h0)
        w_lab, b, gamma, beta = v0[0:1, :], v0[1:2, :], v0[2:3, :], v0[3:4, :]

        act = jnp.dot(h_ref[...].astype(jnp.bfloat16), w0,
                      preferred_element_type=jnp.float32)
        act = act + label * w_lab + b
        act = jnp.maximum(act, 0.0)
        if apply_bn:
            act = batch_norm(act, gamma, beta)

        # ---- hidden layers 1..n-1 (true widths, no max_w padding).
        for i in range(1, n):
            r = w_layout[f"w{i}"]
            w = w_ref[r:r + hidden_dim[i - 1], :hidden_dim[i]]    # bf16
            r = v_layout[f"v{i}"]
            v = v_ref[r:r + 3, :hidden_dim[i]]                    # f32
            b, gamma, beta = v[0:1, :], v[1:2, :], v[2:3, :]
            act = jnp.dot(act.astype(jnp.bfloat16), w,
                          preferred_element_type=jnp.float32) + b
            act = jnp.maximum(act, 0.0)
            if apply_bn:
                act = batch_norm(act, gamma, beta)

        # ---- output layer, lane-dense (1, B): w_out (1,H) @ act^T (H,B).
        r = v_layout["out"]
        w_out = v_ref[r:r + 1, :hidden_dim[-1]].astype(jnp.bfloat16)   # (1, H)
        b_out = v_ref[r + 1:r + 2, 0:1]                                # (1, 1)
        logits = jax.lax.dot_general(
            w_out, act.astype(jnp.bfloat16),
            dimension_numbers=(((1,), (1,)), ((), ())),
            preferred_element_type=jnp.float32)                         # (1, B)
        out_ref[...] = logits + b_out

    return kernel


# ----------------------------------------------------------------------------
# Forward wrapper
# ----------------------------------------------------------------------------
@functools.partial(jax.jit, static_argnames=("feat_dim", "hidden_dim"))
def discriminator_forward(h, label, w_packed, v_packed, *, feat_dim, hidden_dim):
    """Mirrors Discriminator.forward(h, label) (eval-mode dropout, batch-stat BN)."""
    h = h.astype(jnp.float32)
    label = label.reshape(-1, 1).astype(jnp.float32)
    batch = h.shape[0]
    apply_bn = batch > 1          # matches the PyTorch `if h.shape[0] > 1` branch

    hidden_dim = tuple(hidden_dim)
    w_layout, _, v_layout, _, _ = _build_layout(feat_dim, hidden_dim)
    kernel = _make_kernel(feat_dim, hidden_dim, w_layout, v_layout, apply_bn)

    # Advisory cost estimate so XLA can overlap this tiny op with neighbors.
    flops = 2 * batch * (feat_dim * hidden_dim[0]
                         + sum(hidden_dim[i - 1] * hidden_dim[i]
                               for i in range(1, len(hidden_dim)))
                         + hidden_dim[-1])
    transcendentals = sum(hidden_dim) if apply_bn else 0
    bytes_accessed = (4 * h.size + 4 * label.size
                      + 2 * w_packed.size + 4 * v_packed.size + 4 * batch)

    vmem = pl.BlockSpec(memory_space=pltpu.MemorySpace.VMEM)
    out = pl.pallas_call(
        kernel,
        out_shape=jax.ShapeDtypeStruct((1, batch), jnp.float32),   # lane-dense
        in_specs=[vmem, vmem, vmem, vmem],
        out_specs=vmem,
        compiler_params=pltpu.CompilerParams(
            # 32 MiB is safe on v5e (16 MiB scoped default), v6e and v7x alike;
            # raise only if the resident batch tile grows.
            vmem_limit_bytes=32 * 1024 * 1024),
        cost_estimate=pl.CostEstimate(
            flops=flops,
            transcendentals=transcendentals,
            bytes_accessed=bytes_accessed),
    )(h, label, w_packed, v_packed)

    return jnp.squeeze(out)       # PyTorch .squeeze()


# ----------------------------------------------------------------------------
# Init (PyTorch-equivalent shapes) + pure-JAX reference (mirrors bf16 MXU math)
# ----------------------------------------------------------------------------
def init_discriminator_params(key, in_dim, hidden_dim):
    """Weights xavier_uniform (stored transposed: (in, out)); biases
    U(+-1/sqrt(fan_in)); BN gamma=1, beta=0."""
    ins = [in_dim] + list(hidden_dim[:-1])
    outs = list(hidden_dim)

    params = {"hidden": [], "out": None}
    for fan_in, fan_out in zip(ins, outs):
        key, kw, kb = jax.random.split(key, 3)
        a = (6.0 / (fan_in + fan_out)) ** 0.5
        w = jax.random.uniform(kw, (fan_in, fan_out), jnp.float32, -a, a)
        bb = 1.0 / (fan_in ** 0.5)
        b = jax.random.uniform(kb, (1, fan_out), jnp.float32, -bb, bb)
        gamma = jnp.ones((1, fan_out), jnp.float32)
        beta = jnp.zeros((1, fan_out), jnp.float32)
        params["hidden"].append((w, b, gamma, beta))

    fan_in, fan_out = hidden_dim[-1], 1
    key, kw, kb = jax.random.split(key, 3)
    a = (6.0 / (fan_in + fan_out)) ** 0.5
    w_out = jax.random.uniform(kw, (fan_in, fan_out), jnp.float32, -a, a)
    bb = 1.0 / (fan_in ** 0.5)
    b_out = jax.random.uniform(kb, (1, fan_out), jnp.float32, -bb, bb)
    params["out"] = (w_out, b_out)
    return params


def _reference_forward(h, label, params, *, feat_dim, apply_bn, eps=1e-5):
    """Pure-JAX reference mirroring the kernel's precision (bf16 MXU, f32 rest)."""
    label = label.reshape(-1, 1).astype(jnp.float32)
    h = h.astype(jnp.float32)

    def bn(a, g, be):
        m = jnp.mean(a, axis=0, keepdims=True)
        v = jnp.mean((a - m) ** 2, axis=0, keepdims=True)
        return (a - m) * (g * jax.lax.rsqrt(v + eps)) + be

    w0, b0, g0, be0 = params["hidden"][0]
    act = jnp.dot(h.astype(jnp.bfloat16), w0[:feat_dim].astype(jnp.bfloat16),
                  preferred_element_type=jnp.float32)
    act = act + label * w0[feat_dim:feat_dim + 1] + b0
    act = jnp.maximum(act, 0.0)
    if apply_bn:
        act = bn(act, g0, be0)

    for (w, b, g, be) in params["hidden"][1:]:
        act = jnp.dot(act.astype(jnp.bfloat16), w.astype(jnp.bfloat16),
                      preferred_element_type=jnp.float32) + b
        act = jnp.maximum(act, 0.0)
        if apply_bn:
            act = bn(act, g, be)

    w_out, b_out = params["out"]
    logits = jnp.dot(act.astype(jnp.bfloat16), w_out.astype(jnp.bfloat16),
                     preferred_element_type=jnp.float32) + b_out
    return jnp.squeeze(logits)


if __name__ == "__main__":
    key = jax.random.PRNGKey(0)

    batch = 8
    feat_dim = 15             # features of `h`
    in_dim = feat_dim + 1     # +1 for the concatenated label column
    hidden_dim = (32, 16)

    k_h, k_lab, k_params = jax.random.split(key, 3)
    h = jax.random.normal(k_h, (batch, feat_dim), jnp.float32)
    label = (jax.random.uniform(k_lab, (batch,)) > 0.5).astype(jnp.float32)

    params = init_discriminator_params(k_params, in_dim, list(hidden_dim))
    w_packed, v_packed = pack_params(params, feat_dim, hidden_dim)

    out = discriminator_forward(h, label, w_packed, v_packed,
                                feat_dim=feat_dim, hidden_dim=hidden_dim)
    out = jax.block_until_ready(out)

    ref = _reference_forward(h, label, params,
                             feat_dim=feat_dim, apply_bn=batch > 1)
    assert out.shape == (batch,), out.shape
    assert jnp.allclose(out, ref, atol=2e-3, rtol=2e-3), (out, ref)

    print("KERNEL_OK")
</pallas_src>

<mosaic_0001>
module attributes {stable_mosaic.version = 11 : i64} {
  func.func @kernel(%arg0: memref<8x15xf32, #tpu.memory_space<vmem>>, %arg1: memref<8x1xf32, #tpu.memory_space<vmem>>, %arg2: memref<48x32xbf16, #tpu.memory_space<vmem>>, %arg3: memref<24x32xf32, #tpu.memory_space<vmem>>, %arg4: memref<1x8xf32, #tpu.memory_space<vmem>>) attributes {dimension_semantics = [], scalar_prefetch = 0 : i64, scratch_operands = 0 : i64, tpu.core_type = #tpu.core_type<tc>} {
    %c0 = arith.constant 0 : index
    %c0_0 = arith.constant 0 : index
    %0 = vector.load %arg1[%c0, %c0_0] : memref<8x1xf32, #tpu.memory_space<vmem>>, vector<8x1xf32>
    %c0_1 = arith.constant 0 : index
    %c0_2 = arith.constant 0 : index
    %1 = vector.load %arg2[%c0_1, %c0_2] : memref<48x32xbf16, #tpu.memory_space<vmem>>, vector<15x32xbf16>
    %c0_3 = arith.constant 0 : index
    %c0_4 = arith.constant 0 : index
    %2 = vector.load %arg3[%c0_3, %c0_4] : memref<24x32xf32, #tpu.memory_space<vmem>>, vector<4x32xf32>
    %3 = vector.extract_strided_slice %2 {offsets = [0, 0], sizes = [1, 32], strides = [1, 1]} : vector<4x32xf32> to vector<1x32xf32>
    %4 = vector.extract_strided_slice %2 {offsets = [1, 0], sizes = [1, 32], strides = [1, 1]} : vector<4x32xf32> to vector<1x32xf32>
    %5 = vector.extract_strided_slice %2 {offsets = [2, 0], sizes = [1, 32], strides = [1, 1]} : vector<4x32xf32> to vector<1x32xf32>
    %6 = vector.extract_strided_slice %2 {offsets = [3, 0], sizes = [1, 32], strides = [1, 1]} : vector<4x32xf32> to vector<1x32xf32>
    %c0_5 = arith.constant 0 : index
    %c0_6 = arith.constant 0 : index
    %7 = vector.load %arg0[%c0_5, %c0_6] : memref<8x15xf32, #tpu.memory_space<vmem>>, vector<8x15xf32>
    %8 = arith.truncf %7 : vector<8x15xf32> to vector<8x15xbf16>
    %cst = arith.constant dense<0.000000e+00> : vector<8x32xf32>
    %9 = tpu.matmul %8, %1, %cst {dimension_numbers = #tpu.dot_dimension_numbers<[1], [0], [0], [1], [0, 0, 1, 1], [], []>} : vector<8x15xbf16>, vector<15x32xbf16>, vector<8x32xf32> -> vector<8x32xf32>
    %10 = vector.broadcast %0 : vector<8x1xf32> to vector<8x32xf32>
    %11 = vector.broadcast %3 : vector<1x32xf32> to vector<8x32xf32>
    %12 = arith.mulf %10, %11 : vector<8x32xf32>
    %13 = arith.addf %9, %12 : vector<8x32xf32>
    %14 = vector.broadcast %4 : vector<1x32xf32> to vector<8x32xf32>
    %15 = arith.addf %13, %14 : vector<8x32xf32>
    %cst_7 = arith.constant 0.000000e+00 : f32
    %16 = vector.broadcast %cst_7 : f32 to vector<8x32xf32>
    %17 = arith.maximumf %15, %16 : vector<8x32xf32>
    %cst_8 = arith.constant dense<0.000000e+00> : vector<32xf32>
    %18 = vector.multi_reduction <add>, %17, %cst_8 [0] : vector<8x32xf32> to vector<32xf32>
    %19 = vector.shape_cast %18 : vector<32xf32> to vector<1x32xf32>
    %cst_9 = arith.constant 8.000000e+00 : f32
    %20 = vector.broadcast %cst_9 : f32 to vector<1x32xf32>
    %21 = arith.divf %19, %20 : vector<1x32xf32>
    %22 = vector.broadcast %21 : vector<1x32xf32> to vector<8x32xf32>
    %23 = arith.subf %17, %22 : vector<8x32xf32>
    %24 = arith.mulf %23, %23 : vector<8x32xf32>
    %cst_10 = arith.constant dense<0.000000e+00> : vector<32xf32>
    %25 = vector.multi_reduction <add>, %24, %cst_10 [0] : vector<8x32xf32> to vector<32xf32>
    %26 = vector.shape_cast %25 : vector<32xf32> to vector<1x32xf32>
    %cst_11 = arith.constant 8.000000e+00 : f32
    %27 = vector.broadcast %cst_11 : f32 to vector<1x32xf32>
    %28 = arith.divf %26, %27 : vector<1x32xf32>
    %cst_12 = arith.constant 9.99999974E-6 : f32
    %29 = vector.broadcast %cst_12 : f32 to vector<1x32xf32>
    %30 = arith.addf %28, %29 : vector<1x32xf32>
    %31 = math.rsqrt %30 : vector<1x32xf32>
    %32 = arith.mulf %5, %31 : vector<1x32xf32>
    %33 = vector.broadcast %32 : vector<1x32xf32> to vector<8x32xf32>
    %34 = arith.mulf %23, %33 : vector<8x32xf32>
    %35 = vector.broadcast %6 : vector<1x32xf32> to vector<8x32xf32>
    %36 = arith.addf %34, %35 : vector<8x32xf32>
    %c16 = arith.constant 16 : index
    %c0_13 = arith.constant 0 : index
    %37 = vector.load %arg2[%c16, %c0_13] : memref<48x32xbf16, #tpu.memory_space<vmem>>, vector<32x16xbf16>
    %c8 = arith.constant 8 : index
    %c0_14 = arith.constant 0 : index
    %38 = vector.load %arg3[%c8, %c0_14] : memref<24x32xf32, #tpu.memory_space<vmem>>, vector<3x16xf32>
    %39 = vector.extract_strided_slice %38 {offsets = [0, 0], sizes = [1, 16], strides = [1, 1]} : vector<3x16xf32> to vector<1x16xf32>
    %40 = vector.extract_strided_slice %38 {offsets = [1, 0], sizes = [1, 16], strides = [1, 1]} : vector<3x16xf32> to vector<1x16xf32>
    %41 = vector.extract_strided_slice %38 {offsets = [2, 0], sizes = [1, 16], strides = [1, 1]} : vector<3x16xf32> to vector<1x16xf32>
    %42 = arith.truncf %36 : vector<8x32xf32> to vector<8x32xbf16>
    %cst_15 = arith.constant dense<0.000000e+00> : vector<8x16xf32>
    %43 = tpu.matmul %42, %37, %cst_15 {dimension_numbers = #tpu.dot_dimension_numbers<[1], [0], [0], [1], [0, 0, 1, 1], [], []>} : vector<8x32xbf16>, vector<32x16xbf16>, vector<8x16xf32> -> vector<8x16xf32>
    %44 = vector.broadcast %39 : vector<1x16xf32> to vector<8x16xf32>
    %45 = arith.addf %43, %44 : vector<8x16xf32>
    %cst_16 = arith.constant 0.000000e+00 : f32
    %46 = vector.broadcast %cst_16 : f32 to vector<8x16xf32>
    %47 = arith.maximumf %45, %46 : vector<8x16xf32>
    %cst_17 = arith.constant dense<0.000000e+00> : vector<16xf32>
    %48 = vector.multi_reduction <add>, %47, %cst_17 [0] : vector<8x16xf32> to vector<16xf32>
    %49 = vector.shape_cast %48 : vector<16xf32> to vector<1x16xf32>
    %cst_18 = arith.constant 8.000000e+00 : f32
    %50 = vector.broadcast %cst_18 : f32 to vector<1x16xf32>
    %51 = arith.divf %49, %50 : vector<1x16xf32>
    %52 = vector.broadcast %51 : vector<1x16xf32> to vector<8x16xf32>
    %53 = arith.subf %47, %52 : vector<8x16xf32>
    %54 = arith.mulf %53, %53 : vector<8x16xf32>
    %cst_19 = arith.constant dense<0.000000e+00> : vector<16xf32>
    %55 = vector.multi_reduction <add>, %54, %cst_19 [0] : vector<8x16xf32> to vector<16xf32>
    %56 = vector.shape_cast %55 : vector<16xf32> to vector<1x16xf32>
    %cst_20 = arith.constant 8.000000e+00 : f32
    %57 = vector.broadcast %cst_20 : f32 to vector<1x16xf32>
    %58 = arith.divf %56, %57 : vector<1x16xf32>
    %cst_21 = arith.constant 9.99999974E-6 : f32
    %59 = vector.broadcast %cst_21 : f32 to vector<1x16xf32>
    %60 = arith.addf %58, %59 : vector<1x16xf32>
    %61 = math.rsqrt %60 : vector<1x16xf32>
    %62 = arith.mulf %40, %61 : vector<1x16xf32>
    %63 = vector.broadcast %62 : vector<1x16xf32> to vector<8x16xf32>
    %64 = arith.mulf %53, %63 : vector<8x16xf32>
    %65 = vector.broadcast %41 : vector<1x16xf32> to vector<8x16xf32>
    %66 = arith.addf %64, %65 : vector<8x16xf32>
    %c16_22 = arith.constant 16 : index
    %c0_23 = arith.constant 0 : index
    %67 = vector.load %arg3[%c16_22, %c0_23] : memref<24x32xf32, #tpu.memory_space<vmem>>, vector<1x16xf32>
    %68 = arith.truncf %67 : vector<1x16xf32> to vector<1x16xbf16>
    %c17 = arith.constant 17 : index
    %c0_24 = arith.constant 0 : index
    %69 = vector.load %arg3[%c17, %c0_24] : memref<24x32xf32, #tpu.memory_space<vmem>>, vector<1x1xf32>
    %70 = arith.truncf %66 : vector<8x16xf32> to vector<8x16xbf16>
    %cst_25 = arith.constant dense<0.000000e+00> : vector<1x8xf32>
    %71 = tpu.matmul %68, %70, %cst_25 {dimension_numbers = #tpu.dot_dimension_numbers<[1], [1], [0], [0], [0, 0, 1, 0], [], []>} : vector<1x16xbf16>, vector<8x16xbf16>, vector<1x8xf32> -> vector<1x8xf32>
    %72 = vector.broadcast %69 : vector<1x1xf32> to vector<1x8xf32>
    %73 = arith.addf %71, %72 : vector<1x8xf32>
    %c0_26 = arith.constant 0 : index
    %c0_27 = arith.constant 0 : index
    %74 = vector.load %arg4[%c0_26, %c0_27] : memref<1x8xf32, #tpu.memory_space<vmem>>, vector<1x8xf32>
    tpu.vector_store %arg4[%c0_26, %c0_27], %73 {strides = array<i32>} : memref<1x8xf32, #tpu.memory_space<vmem>>, vector<1x8xf32>,
    return
  }
}

</mosaic_0001>

<llo_original>
// kernel: discriminator_forward.1
$region0: #{discriminator_forward.1}
  #allocation0 [shape = 'u32[]', space=smem, size = 0x4, offset = 0x4, fixed_abs, tag = 'smem constant byte address 0x4 - core index']
  #allocation1 [shape = 'u32[144,128]{1,0:T(1,128)}', space=vmem, size = 0x12000, scoped, tag = 'internal scratch']
  %s0 = inlined_call_operand.vmem [shape: f32[8,15], index: 0, kind: input, shape index: {}]
  %s1 = inlined_call_operand.vmem [shape: f32[8,1], index: 1, kind: input, shape index: {}]
  %s2 = inlined_call_operand.vmem [shape: bf16[48,32], index: 2, kind: input, shape index: {}]
  %s3 = inlined_call_operand.vmem [shape: f32[24,32], index: 3, kind: input, shape index: {}]
  %s4 = inlined_call_operand.hbm [shape: f32[1,8], index: 4, kind: output, shape index: {}]
  %s5 = sld [smem:[#allocation0]]
  $region26: #{discriminator_forward.1} parent=0
    _
  %s7 = ssub.s32 1, %s5
  %s8 = scalar_select 0, %s7, %s5
  $region1: #{discriminator_forward.1} parent=0
    #allocation2 [shape = 'u8[512]{0}', space=vmem, size = 0x400, scoped, tag = 'output window, operand 0, single buffered']
    #allocation3 [shape = 's32[1]{0}', space=sflag, size = 0x4, scoped, tag = 'scoped memory for discriminator_forward.1']
    %9 = vsyncpa [#allocation3], 0
    // Predicated region
    $region2: #{discriminator_forward.1} parent=1 // pred_check
      _
    $region3: #{discriminator_forward.1} parent=1 // pred_check_branch
      %11 = sbr.rel (0) target = $region5
    $region4: #{discriminator_forward.1} parent=1 // pred_region
      _
    $region5: #{discriminator_forward.1} parent=1 // pred_fallthru
      _
    // Predicated region
    $region6: #{discriminator_forward.1} parent=1 // pred_check
      _
    $region7: #{discriminator_forward.1} parent=1 // pred_check_branch
      %13 = sbr.rel (0) target = $region9
    $region8: #{discriminator_forward.1} parent=1 // pred_region
      _
    $region9: #{discriminator_forward.1} parent=1 // pred_fallthru
      _
    // Predicated region
    $region10: #{discriminator_forward.1} parent=1 // pred_check
      _
    $region11: #{discriminator_forward.1} parent=1 // pred_check_branch
      %15 = sbr.rel (0) target = $region13
    $region12: #{discriminator_forward.1} parent=1 // pred_region
      _
    $region13: #{discriminator_forward.1} parent=1 // pred_fallthru
      _
    // Predicated region
    $region14: #{discriminator_forward.1} parent=1 // pred_check
      _
    $region15: #{discriminator_forward.1} parent=1 // pred_check_branch
      %17 = sbr.rel (0) target = $region17
    $region16: #{discriminator_forward.1} parent=1 // pred_region
      _
    $region17: #{discriminator_forward.1} parent=1 // pred_fallthru
      _
    %v19 = vld [vmem:[%s1] sm:$0xff]
    %v20 = vld [vmem:[%s2] sm:$0xf]
    %v21 = vld [vmem:[%s2 + $0x4] sm:$0xf]
    %v22 = vld [vmem:[%s3] sm:$0xf]
    %v23 = vld [vmem:[%s0] sm:$0xff]
    %v24 = vpack.c.bf16 %v23, %v23
    %26 = vset.pattern.permute.xlu0 0
    %27 = vperm.xlu0 %26, %v19
    %v28 = vpop.permute.xlu0 %27
    %v30 = vlaneseq
    %v31 = vshrl.u32 %v30, 7
    %v32 = vsub.s32 0, %v31
    %v33 = vrot.slane %v22, %v32
    %v34 = vmul.f32 %v28, %v33
    %v37 = vunpack.c.l.b16 %v20
    %v38 = vunpack.c.l.b16 %v21
    %v39 = vpack.c.b16 %v38, %v37
    %vm40 = vcmask 121856
    %v42 = vsel %vm40, %v24, 0
    %vm44 = vcmask 1046528
    %vm45 = vcmask 1047552
    %v46 = vsel %vm44, 4294967295, 65535
    %v47 = vsel %vm45, %v46, 0
    %v49 = vand.u32 %v39, %v47
    %51 = vmatprep.subr.bf16.mxu0 0
    %52 = vmatpush1.bf16.msra.mxu0 0
    %53 = vmatprep.subr.bf16.mxu0 0
    %54 = vmatpush1.bf16.msra.mxu0 0
    %55 = vmatprep.subr.bf16.mxu0 0
    %56 = vmatpush1.bf16.msra.mxu0 0
    %57 = vmatprep.subr.bf16.mxu0 0
    %58 = vmatpush1.bf16.msra.mxu0 0
    %59 = vmatprep.subr.bf16.mxu0 0
    %60 = vmatpush1.bf16.msra.mxu0 0
    %61 = vmatprep.subr.bf16.mxu0 0
    %62 = vmatpush1.bf16.msra.mxu0 0
    %63 = vmatprep.subr.bf16.mxu0 0
    %64 = vmatpush1.bf16.msra.mxu0 0
    %65 = vmatprep.subr.bf16.mxu0 0
    %66 = vmatpush1.bf16.msra.mxu0 %v49
    %67 = vmatprep.subr.bf16.mxu0 0
    %68 = vmatpush2.bf16.msra.mxu0 0
    %69 = vmatprep.subr.bf16.mxu0 0
    %70 = vmatpush2.bf16.msra.mxu0 0
    %71 = vmatprep.subr.bf16.mxu0 0
    %72 = vmatpush2.bf16.msra.mxu0 0
    %73 = vmatprep.subr.bf16.mxu0 0
    %74 = vmatpush2.bf16.msra.mxu0 0
    %75 = vmatprep.subr.bf16.mxu0 0
    %76 = vmatpush2.bf16.msra.mxu0 0
    %77 = vmatprep.subr.bf16.mxu0 0
    %78 = vmatpush2.bf16.msra.mxu0 0
    %79 = vmatprep.subr.bf16.mxu0 0
    %80 = vmatpush2.bf16.msra.mxu0 0
    %81 = vmatprep.subr.bf16.mxu0 0
    %82 = vmatpush2.bf16.msra.mxu0 0
    %83 = vmatprep.mubr.bf16.mxu0 0
    %84 = vmatmul.mubr.bf16.gmra.mxu0 %v42
    %v85 = vpop.f32.mrf.mxu0
    %v86 = vadd.f32 %v34, %v85
    %v87 = vpop.f32.mrf.mxu0
    %v88 = vpop.f32.mrf.mxu0
    %v89 = vpop.f32.mrf.mxu0
    %90 = vdwg.mxu0
    %v91 = vlaneseq
    %v92 = vshrl.u32 %v91, 7
    %v93 = vsub.s32 1, %v92
    %v94 = vrot.slane %v22, %v93
    %v95 = vadd.f32 %v86, %v94
    %v96 = vmax.f32 %v95, 0.0
    %vm97 = vcmask 261120
    %v98 = vsel %vm97, %v96, 0.0
    %v99 = vrot.slane %v98, 4
    %v100 = vadd.f32 %v98, %v99
    %v101 = vrot.slane %v100, 2
    %v102 = vadd.f32 %v100, %v101
    %v103 = vrot.slane %v102, 1
    %v104 = vadd.f32 %v102, %v103
    %v105 = vrcp.pop 8.0
    %v106 = vmul.f32 %v104, %v105
    %v107 = vsub.f32 %v96, %v106
    %v108 = vmul.f32 %v107, %v107
    %v109 = vsel %vm97, %v108, 0.0
    %v110 = vrot.slane %v109, 4
    %v111 = vadd.f32 %v109, %v110
    %v112 = vrot.slane %v111, 2
    %v113 = vadd.f32 %v111, %v112
    %v114 = vrot.slane %v113, 1
    %v115 = vadd.f32 %v113, %v114
    %v116 = vmul.f32 %v115, %v105
    %v117 = vadd.f32 %v116, 1e-05
    %v118 = vrsqrt.pop %v117
    %v119 = vmul.f32 %v22, %v118
    %v120 = vlaneseq
    %v121 = vshrl.u32 %v120, 7
    %v122 = vsub.s32 2, %v121
    %v123 = vrot.slane %v119, %v122
    %v124 = vmul.f32 %v107, %v123
    %v125 = vlaneseq
    %v126 = vshrl.u32 %v125, 7
    %v127 = vsub.s32 3, %v126
    %v128 = vrot.slane %v22, %v127
    %v129 = vadd.f32 %v124, %v128
    %v130 = vld [vmem:[%s2 + $0x8] sm:$0xf]
    %v131 = vld [vmem:[%s2 + $0xc] sm:$0xf]
    %v132 = vld [vmem:[%s2 + $0x10] sm:$0xf]
    %v133 = vld [vmem:[%s2 + $0x14] sm:$0xf]
    %v134 = vld [vmem:[%s3 + $0x8] sm:$0x7]
    %v135 = vpack.c.bf16 %v129, %v129
    %v136 = vlaneseq
    %v137 = vshrl.u32 %v136, 7
    %v138 = vsub.s32 0, %v137
    %v139 = vrot.slane %v134, %v138
    %v144 = vunpack.c.l.b16 %v130
    %v145 = vunpack.c.l.b16 %v131
    %v146 = vunpack.c.l.b16 %v132
    %v147 = vunpack.c.l.b16 %v133
    %v148 = vpack.c.b16 %v145, %v144
    %v149 = vpack.c.b16 %v147, %v146
    %v153 = vsel %vm97, %v135, 0
    %155 = vmatprep.subr.bf16.mxu0 0
    %156 = vmatpush1.bf16.msra.mxu0 0
    %157 = vmatprep.subr.bf16.mxu0 0
    %158 = vmatpush1.bf16.msra.mxu0 0
    %159 = vmatprep.subr.bf16.mxu0 0
    %160 = vmatpush1.bf16.msra.mxu0 0
    %161 = vmatprep.subr.bf16.mxu0 0
    %162 = vmatpush1.bf16.msra.mxu0 0
    %163 = vmatprep.subr.bf16.mxu0 0
    %164 = vmatpush1.bf16.msra.mxu0 0
    %165 = vmatprep.subr.bf16.mxu0 0
    %166 = vmatpush1.bf16.msra.mxu0 0
    %167 = vmatprep.subr.bf16.mxu0 0
    %168 = vmatpush1.bf16.msra.mxu0 %v149
    %169 = vmatprep.subr.bf16.mxu0 0
    %170 = vmatpush1.bf16.msra.mxu0 %v148
    %171 = vmatprep.subr.bf16.mxu0 0
    %172 = vmatpush2.bf16.msra.mxu0 0
    %173 = vmatprep.subr.bf16.mxu0 0
    %174 = vmatpush2.bf16.msra.mxu0 0
    %175 = vmatprep.subr.bf16.mxu0 0
    %176 = vmatpush2.bf16.msra.mxu0 0
    %177 = vmatprep.subr.bf16.mxu0 0
    %178 = vmatpush2.bf16.msra.mxu0 0
    %179 = vmatprep.subr.bf16.mxu0 0
    %180 = vmatpush2.bf16.msra.mxu0 0
    %181 = vmatprep.subr.bf16.mxu0 0
    %182 = vmatpush2.bf16.msra.mxu0 0
    %183 = vmatprep.subr.bf16.mxu0 0
    %184 = vmatpush2.bf16.msra.mxu0 0
    %185 = vmatprep.subr.bf16.mxu0 0
    %186 = vmatpush2.bf16.msra.mxu0 0
    %187 = vmatprep.mubr.bf16.mxu0 0
    %188 = vmatmul.mubr.bf16.gmra.mxu0 %v153
    %v189 = vpop.f32.mrf.mxu0
    %v190 = vadd.f32 %v139, %v189
    %v191 = vpop.f32.mrf.mxu0
    %v192 = vpop.f32.mrf.mxu0
    %v193 = vpop.f32.mrf.mxu0
    %194 = vdwg.mxu0
    %v195 = vmax.f32 %v190, 0.0
    %vm196 = vcmask 130048
    %v197 = vsel %vm196, %v195, 0.0
    %v198 = vrot.slane %v197, 4
    %v199 = vadd.f32 %v197, %v198
    %v200 = vrot.slane %v199, 2
    %v201 = vadd.f32 %v199, %v200
    %v202 = vrot.slane %v201, 1
    %v203 = vadd.f32 %v201, %v202
    %v204 = vmul.f32 %v203, %v105
    %v205 = vsub.f32 %v195, %v204
    %v206 = vmul.f32 %v205, %v205
    %v207 = vsel %vm196, %v206, 0.0
    %v208 = vrot.slane %v207, 4
    %v209 = vadd.f32 %v207, %v208
    %v210 = vrot.slane %v209, 2
    %v211 = vadd.f32 %v209, %v210
    %v212 = vrot.slane %v211, 1
    %v213 = vadd.f32 %v211, %v212
    %v214 = vmul.f32 %v213, %v105
    %v215 = vadd.f32 %v214, 1e-05
    %v216 = vrsqrt.pop %v215
    %v217 = vmul.f32 %v134, %v216
    %v218 = vlaneseq
    %v219 = vshrl.u32 %v218, 7
    %v220 = vsub.s32 1, %v219
    %v221 = vrot.slane %v217, %v220
    %v222 = vmul.f32 %v205, %v221
    %v223 = vlaneseq
    %v224 = vshrl.u32 %v223, 7
    %v225 = vsub.s32 2, %v224
    %v226 = vrot.slane %v134, %v225
    %v227 = vadd.f32 %v222, %v226
    %v228 = vld [vmem:[%s3 + $0x10] sm:$0x1]
    %v229 = vpack.c.bf16 %v228, %v228
    %v230 = vld [vmem:[%s3 + $0x11] sm:$0x1]
    %v231 = vpack.c.bf16 %v227, %v227
    %233 = vset.pattern.permute.xlu0 0
    %234 = vperm.xlu0 %233, %v230
    %v235 = vpop.permute.xlu0 %234
    %v238 = vsel %vm196, %v229, 0
    %v241 = vsel %vm196, %v231, 0
    %243 = vmatprep.subr.bf16.mxu0 0
    %244 = vmatpush1.bf16.xpose.msra.mxu0 0
    %245 = vmatprep.subr.bf16.mxu0 0
    %246 = vmatpush1.bf16.xpose.msra.mxu0 0
    %247 = vmatprep.subr.bf16.mxu0 0
    %248 = vmatpush1.bf16.xpose.msra.mxu0 0
    %249 = vmatprep.subr.bf16.mxu0 0
    %250 = vmatpush1.bf16.xpose.msra.mxu0 0
    %251 = vmatprep.subr.bf16.mxu0 0
    %252 = vmatpush1.bf16.xpose.msra.mxu0 0
    %253 = vmatprep.subr.bf16.mxu0 0
    %254 = vmatpush1.bf16.xpose.msra.mxu0 0
    %255 = vmatprep.subr.bf16.mxu0 0
    %256 = vmatpush1.bf16.xpose.msra.mxu0 0
    %257 = vmatprep.subr.bf16.mxu0 0
    %258 = vmatpush1.bf16.xpose.msra.mxu0 %v241
    %259 = vmatprep.subr.bf16.mxu0 0
    %260 = vmatpush2.bf16.xpose.msra.mxu0 0
    %261 = vmatprep.subr.bf16.mxu0 0
    %262 = vmatpush2.bf16.xpose.msra.mxu0 0
    %263 = vmatprep.subr.bf16.mxu0 0
    %264 = vmatpush2.bf16.xpose.msra.mxu0 0
    %265 = vmatprep.subr.bf16.mxu0 0
    %266 = vmatpush2.bf16.xpose.msra.mxu0 0
    %267 = vmatprep.subr.bf16.mxu0 0
    %268 = vmatpush2.bf16.xpose.msra.mxu0 0
    %269 = vmatprep.subr.bf16.mxu0 0
    %270 = vmatpush2.bf16.xpose.msra.mxu0 0
    %271 = vmatprep.subr.bf16.mxu0 0
    %272 = vmatpush2.bf16.xpose.msra.mxu0 0
    %273 = vmatprep.subr.bf16.mxu0 0
    %274 = vmatpush2.bf16.xpose.msra.mxu0 0
    %275 = vmatprep.mubr.bf16.mxu0 0
    %276 = vmatmul.mubr.bf16.gmra.mxu0 %v238
    %v277 = vpop.f32.mrf.mxu0
    %v278 = vadd.f32 %v235, %v277
    %v279 = vpop.f32.mrf.mxu0
    %v280 = vpop.f32.mrf.mxu0
    %v281 = vpop.f32.mrf.mxu0
    %282 = vdwg.mxu0
    %vm283 = vcmask 57344
    %284 = vst.msk [vmem:[#allocation2] sm:$0x1] %vm283, %v278
    // Predicated region
    $region18: #{discriminator_forward.1} parent=1 // pred_check
      _
    $region19: #{discriminator_forward.1} parent=1 // pred_check_branch
      %286 = sbr.rel (0) target = $region21
    $region20: #{discriminator_forward.1} parent=1 // pred_region
      %s288 = ssub.s32 16, 16
      %289 = vsyncadd [#allocation3], %s288
      %s291 = sshll.u32 [#allocation2], 4
      %s292 = int_to_ptr.vmem [resolvable:$true] %s291
      %294 = dma.vmem_to_hbm [thread:$0]  %s292, 16, %s4, [#allocation3]
    $region21: #{discriminator_forward.1} parent=1 // pred_fallthru
      _
    // Predicated region
    $region22: #{discriminator_forward.1} parent=1 // pred_check
      _
    $region23: #{discriminator_forward.1} parent=1 // pred_check_branch
      %296 = sbr.rel (0) target = $region25
    $region24: #{discriminator_forward.1} parent=1 // pred_region
      %297 = dma.done [#allocation3], 16
    $region25: #{discriminator_forward.1} parent=1 // pred_fallthru
      _
    %298 = vsyncpa [#allocation3], 1

</llo_original>
